<compile_context>
chip_gen: v7x
topology: tpu7x:2x2x1
jax: 0.10.0
libtpu: 0.0.40
codegen_flags: <defaults>
</compile_context>

<pallas_src>
import functools

import jax
import jax.numpy as jnp
from jax.experimental import pallas as pl
from jax.experimental.pallas import tpu as pltpu


def _round_up(x, m):
    return ((x + m - 1) // m) * m


def _vmem_limit_bytes():
    """Generation-aware scoped-VMEM budget: 64 MiB on 128-MiB parts (v5e/v6e),
    32 MiB on 64-MiB parts (v7x); safe 32 MiB fallback if the query fails."""
    default = 32 * 1024 * 1024
    try:
        cap = int(pltpu.get_tpu_info().vmem_capacity_bytes)
    except Exception:
        return default
    if cap >= 96 * 1024 * 1024:          # v5e / v6e: 128 MiB physical VMEM
        return 64 * 1024 * 1024
    return min(default, max(cap // 2, 16 * 1024 * 1024))


def _pick_seq_block(seq_len, bytes_per_seq_row, target_bytes):
    """Largest multiple-of-128 divisor of seq_len whose tile fits target_bytes;
    falls back to the smallest such divisor, else the full sequence (also used
    when S % 128 != 0, since the 2-D mask block needs a lane-dense last dim)."""
    if seq_len % 128 != 0:
        return seq_len
    budget_rows = max(128, (target_bytes // max(bytes_per_seq_row, 1)) // 128 * 128)
    best = None
    c = 128
    while c <= seq_len:
        if seq_len % c == 0 and c <= budget_rows:
            best = c
        c += 128
    return best if best is not None else 128


# ---------------------------------------------------------------------------
# Streaming kernel: 'mean' / 'max' pooling + classifier.
# refs = (h_ref, [m_ref], w_ref, bias_ref, o_ref, acc_ref, den_ref)
# Activations/mask stay in their native dtype; accumulation is f32 in VMEM.
# ---------------------------------------------------------------------------
def _pool_classify_kernel(*refs, strategy, has_mask, seq_len):
    if has_mask:
        h_ref, m_ref, w_ref, bias_ref, o_ref, acc_ref, den_ref = refs
    else:
        h_ref, w_ref, bias_ref, o_ref, acc_ref, den_ref = refs
        m_ref = None

    s = pl.program_id(1)

    @pl.when(s == 0)
    def _init():
        if strategy == "max":
            acc_ref[...] = jnp.full(acc_ref.shape, -jnp.inf, acc_ref.dtype)
        else:
            acc_ref[...] = jnp.zeros_like(acc_ref)
        if strategy == "mean" and has_mask:
            den_ref[...] = jnp.zeros_like(den_ref)

    h = h_ref[...]                                        # native dtype (bf16 / f32)

    if strategy == "mean":
        if has_mask:
            m = m_ref[...]                                # native dtype, exact 0/1
        else:
            m = jnp.ones(h.shape[:2], dtype=h.dtype)
        # (Masked) sum over the sequence tile on the MXU with f32 accumulation.
        acc_ref[...] += jnp.einsum("bs,bsd->bd", m, h,
                                   preferred_element_type=jnp.float32)
        if has_mask:
            # f32 count so long sequences don't overflow bf16 integer range.
            den_ref[...] += jnp.sum(m.astype(jnp.float32), axis=1, keepdims=True)
    elif strategy == "max":
        if has_mask:
            m = m_ref[...]
            neg_inf = jnp.asarray(-jnp.inf, dtype=h.dtype)
            h = jnp.where(m[:, :, None] > 0, h, neg_inf)
        part = jnp.max(h, axis=1)                         # exact in native dtype
        acc_ref[...] = jnp.maximum(acc_ref[...], part.astype(jnp.float32))
    else:
        raise ValueError(f"Unknown pooling strategy: {strategy}")

    @pl.when(s == pl.num_programs(1) - 1)
    def _finalize():
        pooled = acc_ref[...]
        if strategy == "mean":
            if has_mask:
                pooled = pooled / den_ref[...]
            else:
                pooled = pooled / jnp.float32(seq_len)
        logits = jnp.dot(pooled, w_ref[...],
                         preferred_element_type=jnp.float32) + bias_ref[...]
        o_ref[...] = logits.astype(o_ref.dtype)


# ---------------------------------------------------------------------------
# Batched classifier kernel for the 'last' path: (block_rows, D) x (D, Lp) + bias.
# ---------------------------------------------------------------------------
def _classify_rows_kernel(x_ref, w_ref, bias_ref, o_ref):
    o_ref[...] = (jnp.dot(x_ref[...], w_ref[...],
                          preferred_element_type=jnp.float32)
                  + bias_ref[...]).astype(o_ref.dtype)


def _classify_rows(pooled, w_p, b_p, vmem_limit):
    B, D = pooled.shape
    Lp = w_p.shape[1]
    block_rows = B
    if B > 8 and B % 8 == 0:
        for cand in (1024, 512, 256, 128, 64, 32, 16, 8):
            if B % cand == 0:
                block_rows = cand
                break
    return pl.pallas_call(
        _classify_rows_kernel,
        out_shape=jax.ShapeDtypeStruct((B, Lp), jnp.float32),
        grid_spec=pltpu.PrefetchScalarGridSpec(
            num_scalar_prefetch=0,
            grid=(B // block_rows,),
            in_specs=[pl.BlockSpec((block_rows, D), lambda i: (i, 0)),
                      pl.BlockSpec((D, Lp), lambda i: (0, 0)),
                      pl.BlockSpec((1, Lp), lambda i: (0, 0))],
            out_specs=pl.BlockSpec((block_rows, Lp), lambda i: (i, 0)),
        ),
        compiler_params=pltpu.CompilerParams(
            dimension_semantics=("parallel",),
            vmem_limit_bytes=vmem_limit),
    )(pooled, w_p, b_p)


def mamba_classification_head(hidden_states,
                              weight_t,
                              bias,
                              attention_mask=None,
                              pooling_strategy="last"):
    """hidden_states: (B, S, D) (native dtype), weight_t: (D, L) == torch weight.T,
    bias: (L,), attention_mask: optional (B, S). Returns logits (B, L) float32."""
    B, S, D = hidden_states.shape
    L = weight_t.shape[1]
    Lp = _round_up(L, 128)                               # lane-dense classifier / output

    w_p = weight_t if Lp == L else jnp.pad(weight_t, ((0, 0), (0, Lp - L)))
    b_p = bias.astype(jnp.float32).reshape(1, L)
    if Lp != L:
        b_p = jnp.pad(b_p, ((0, 0), (0, Lp - L)))

    vmem_limit = _vmem_limit_bytes()

    if pooling_strategy == "last":
        # Single-token gather: one XLA gather reading only B*D elements (no per-row
        # grid steps, no unaligned packed-row DMAs); classifier GEMM runs in Pallas.
        if attention_mask is None:
            pooled = hidden_states[:, -1]
        else:
            lengths = jnp.sum(attention_mask.astype(jnp.int32), axis=1)
            # (-1) % S == S-1 matches torch's negative-index wrap for all-zero rows.
            seq_idx = ((lengths - 1) % S).astype(jnp.int32)
            pooled = hidden_states[jnp.arange(B), seq_idx]
        out = _classify_rows(pooled, w_p, b_p, vmem_limit)
        return out[:, :L]

    if pooling_strategy not in ("mean", "max"):
        raise ValueError(f"Unknown pooling strategy: {pooling_strategy}")

    has_mask = attention_mask is not None
    block_b = 8 if (B > 8 and B % 8 == 0) else B
    itemsize = jnp.dtype(hidden_states.dtype).itemsize
    target_tile_bytes = max(1 << 20, vmem_limit // 4)    # double-buffered tile fits
    block_s = _pick_seq_block(S, block_b * D * itemsize, target_tile_bytes)

    kernel = functools.partial(_pool_classify_kernel,
                               strategy=pooling_strategy,
                               has_mask=has_mask,
                               seq_len=S)

    in_specs = [pl.BlockSpec((block_b, block_s, D), lambda b, s: (b, s, 0))]
    operands = [hidden_states]
    if has_mask:
        in_specs.append(pl.BlockSpec((block_b, block_s), lambda b, s: (b, s)))
        # Mask travels in the activation dtype: halves its HBM traffic for bf16
        # activations and keeps the masked-sum einsum on the fast MXU path.
        operands.append(attention_mask.astype(hidden_states.dtype))
    in_specs += [pl.BlockSpec((D, Lp), lambda b, s: (0, 0)),
                 pl.BlockSpec((1, Lp), lambda b, s: (0, 0))]
    operands += [w_p, b_p]

    out = pl.pallas_call(
        kernel,
        out_shape=jax.ShapeDtypeStruct((B, Lp), jnp.float32),
        grid_spec=pltpu.PrefetchScalarGridSpec(
            num_scalar_prefetch=0,
            grid=(B // block_b, S // block_s),
            in_specs=in_specs,
            out_specs=pl.BlockSpec((block_b, Lp), lambda b, s: (b, 0)),
            scratch_shapes=[pltpu.VMEM((block_b, D), jnp.float32),   # pooled accumulator
                            pltpu.VMEM((block_b, 1), jnp.float32)],  # mask-count (mean)
        ),
        compiler_params=pltpu.CompilerParams(
            dimension_semantics=("parallel", "arbitrary"),
            vmem_limit_bytes=vmem_limit),
    )(*operands)
    return out[:, :L]


def _reference(hidden_states, weight_t, bias, attention_mask, pooling_strategy):
    h = hidden_states.astype(jnp.float32)
    B, S, D = h.shape
    if attention_mask is None:
        attention_mask = jnp.ones((B, S), jnp.float32)
    m = attention_mask.astype(jnp.float32)
    if pooling_strategy == "last":
        idx = (jnp.sum(m, axis=1) - 1).astype(jnp.int32)
        pooled = h[jnp.arange(B), idx]
    elif pooling_strategy == "mean":
        pooled = jnp.sum(h * m[:, :, None], axis=1) / jnp.sum(m, axis=1, keepdims=True)
    else:  # max
        pooled = jnp.max(jnp.where(m[:, :, None] == 0, -jnp.inf, h), axis=1)
    return pooled @ weight_t.astype(jnp.float32) + bias.astype(jnp.float32)


if __name__ == "__main__":
    # Shapes implied by the module: hidden_states (batch, seq_len, d_model).
    B, S, D, L = 2, 8, 32, 4

    key = jax.random.PRNGKey(0)
    k_h, k_w, _ = jax.random.split(key, 3)

    hidden_f32 = jax.random.normal(k_h, (B, S, D), dtype=jnp.float32)

    # nn.Linear(d_model, num_labels) with normal_(std=0.02) weights, zero bias,
    # stored pre-transposed as (D, L) = weight.T.
    weight_t = 0.02 * jax.random.normal(k_w, (D, L), dtype=jnp.float32)
    bias = jnp.zeros((L,), dtype=jnp.float32)

    # Attention mask with ragged valid lengths (1s then 0s per row).
    lengths = jnp.array([5, 8], dtype=jnp.int32)
    attention_mask = (jnp.arange(S)[None, :] < lengths[:, None]).astype(jnp.float32)

    ok = True
    for dtype, tol in ((jnp.float32, 1e-5), (jnp.bfloat16, 5e-3)):
        hidden = hidden_f32.astype(dtype)
        for strategy in ("last", "mean", "max"):
            for mask in (attention_mask, None):
                out = mamba_classification_head(
                    hidden, weight_t, bias,
                    attention_mask=mask, pooling_strategy=strategy)
                out = jax.block_until_ready(out)
                ref = _reference(hidden, weight_t, bias, mask, strategy)
                if not jnp.allclose(out, ref, atol=tol, rtol=tol):
                    ok = False
                    print(f"MISMATCH dtype={jnp.dtype(dtype).name} strategy={strategy} "
                          f"mask={'yes' if mask is not None else 'no'}")

    if ok:
        print("KERNEL_OK")
</pallas_src>

<mosaic_0001>
module attributes {stable_mosaic.version = 11 : i64} {
  func.func @_classify_rows_kernel(%arg0: i32, %arg1: memref<2x32xf32, #tpu.memory_space<vmem>>, %arg2: memref<32x128xf32, #tpu.memory_space<vmem>>, %arg3: memref<1x128xf32, #tpu.memory_space<vmem>>, %arg4: memref<2x128xf32, #tpu.memory_space<vmem>>) attributes {dimension_semantics = [#tpu.dimension_semantics<parallel>], iteration_bounds = array<i64: 1>, scalar_prefetch = 0 : i64, scratch_operands = 0 : i64, tpu.core_type = #tpu.core_type<tc>, window_params = [{transform_indices = @transform_0, window_bounds = array<i64: 2, 32>}, {pipeline_mode = #tpu.pipeline_mode<synchronous>, transform_indices = @transform_1, window_bounds = array<i64: 32, 128>}, {pipeline_mode = #tpu.pipeline_mode<synchronous>, transform_indices = @transform_2, window_bounds = array<i64: 1, 128>}, {transform_indices = @transform_3, window_bounds = array<i64: 2, 128>}]} {
    %c0 = arith.constant 0 : index
    %c0_0 = arith.constant 0 : index
    %0 = vector.load %arg1[%c0, %c0_0] : memref<2x32xf32, #tpu.memory_space<vmem>>, vector<2x32xf32>
    %c0_1 = arith.constant 0 : index
    %c0_2 = arith.constant 0 : index
    %1 = vector.load %arg2[%c0_1, %c0_2] : memref<32x128xf32, #tpu.memory_space<vmem>>, vector<32x128xf32>
    %cst = arith.constant dense<0.000000e+00> : vector<2x128xf32>
    %2 = tpu.matmul %0, %1, %cst {dimension_numbers = #tpu.dot_dimension_numbers<[1], [0], [0], [1], [0, 0, 1, 1], [], []>} : vector<2x32xf32>, vector<32x128xf32>, vector<2x128xf32> -> vector<2x128xf32>
    %c0_3 = arith.constant 0 : index
    %c0_4 = arith.constant 0 : index
    %3 = vector.load %arg3[%c0_3, %c0_4] : memref<1x128xf32, #tpu.memory_space<vmem>>, vector<1x128xf32>
    %4 = vector.broadcast %3 : vector<1x128xf32> to vector<2x128xf32>
    %5 = arith.addf %2, %4 : vector<2x128xf32>
    %c0_5 = arith.constant 0 : index
    %c0_6 = arith.constant 0 : index
    %6 = vector.load %arg4[%c0_5, %c0_6] : memref<2x128xf32, #tpu.memory_space<vmem>>, vector<2x128xf32>
    tpu.vector_store %arg4[%c0_5, %c0_6], %5 {strides = array<i32>} : memref<2x128xf32, #tpu.memory_space<vmem>>, vector<2x128xf32>,
    return
  }
  func.func @transform_0(%arg0: i32) -> (i32, i32) {
    %c0_i32 = arith.constant 0 : i32
    %c0_i32_0 = arith.constant 0 : i32
    return %arg0, %c0_i32 : i32, i32
  }
  func.func @transform_1(%arg0: i32) -> (i32, i32) {
    %c0_i32 = arith.constant 0 : i32
    %c0_i32_0 = arith.constant 0 : i32
    %c0_i32_1 = arith.constant 0 : i32
    return %c0_i32, %c0_i32_0 : i32, i32
  }
  func.func @transform_2(%arg0: i32) -> (i32, i32) {
    %c0_i32 = arith.constant 0 : i32
    %c0_i32_0 = arith.constant 0 : i32
    %c0_i32_1 = arith.constant 0 : i32
    return %c0_i32, %c0_i32_0 : i32, i32
  }
  func.func @transform_3(%arg0: i32) -> (i32, i32) {
    %c0_i32 = arith.constant 0 : i32
    %c0_i32_0 = arith.constant 0 : i32
    return %arg0, %c0_i32 : i32, i32
  }
}

</mosaic_0001>

<llo_original>
// kernel: tpu_custom_call.1
$region0: #{tpu_custom_call.1}
  #allocation0 [shape = 'u32[]', space=smem, size = 0x4, offset = 0x4, fixed_abs, tag = 'smem constant byte address 0x4 - core index']
  #allocation1 [shape = 'u32[144,128]{1,0:T(1,128)}', space=vmem, size = 0x12000, scoped, tag = 'internal scratch']
  %s0 = inlined_call_operand.hbm [shape: f32[2,32], index: 0, kind: input, shape index: {}]
  %s1 = inlined_call_operand.hbm [shape: f32[32,128], index: 1, kind: input, shape index: {}]
  %s2 = inlined_call_operand.vmem [shape: f32[1,128], index: 2, kind: input, shape index: {}]
  %s3 = inlined_call_operand.hbm [shape: f32[2,128], index: 3, kind: output, shape index: {}]
  %s4 = sld [smem:[#allocation0]]
  $region30: #{tpu_custom_call.1} parent=0
    _
  %s6 = ssub.s32 1, %s4
  %s7 = scalar_select 0, %s6, %s4
  $region1: #{tpu_custom_call.1} parent=0
    #allocation2 [shape = 'u8[1024]{0}', space=vmem, size = 0x400, scoped, tag = 'input window, operand 0, single buffered']
    #allocation3 [shape = 's32[1]{0}', space=sflag, size = 0x4, scoped, tag = 'scoped memory for tpu_custom_call.1']
    #allocation4 [shape = 's32[1]{0}', space=sflag, size = 0x4, scoped, tag = 'scoped memory for tpu_custom_call.1']
    #allocation5 [shape = 'u8[16384]{0}', space=vmem, size = 0x4000, scoped, tag = 'input window, operand 1, single buffered']
    #allocation6 [shape = 's32[1]{0}', space=sflag, size = 0x4, scoped, tag = 'scoped memory for tpu_custom_call.1']
    #allocation7 [shape = 'u8[1024]{0}', space=vmem, size = 0x400, scoped, tag = 'output window, operand 0, single buffered']
    %8 = vsyncpa [#allocation3], 0
    %9 = vsyncpa [#allocation6], 0
    %10 = vsyncpa [#allocation4], 0
    // Predicated region
    $region2: #{tpu_custom_call.1} parent=1 // pred_check
      _
    $region3: #{tpu_custom_call.1} parent=1 // pred_check_branch
      %12 = sbr.rel (0) target = $region5
    $region4: #{tpu_custom_call.1} parent=1 // pred_region
      %s14 = ssub.s32 32, 32
      %15 = vsyncadd [#allocation3], %s14
      %s17 = sshll.u32 [#allocation2], 4
      %s18 = int_to_ptr.vmem [resolvable:$true] %s17
      %20 = dma.hbm_to_vmem [thread:$0]  %s0, 32, %s18, [#allocation3]
    $region5: #{tpu_custom_call.1} parent=1 // pred_fallthru
      _
    // Predicated region
    $region6: #{tpu_custom_call.1} parent=1 // pred_check
      _
    $region7: #{tpu_custom_call.1} parent=1 // pred_check_branch
      %22 = sbr.rel (0) target = $region9
    $region8: #{tpu_custom_call.1} parent=1 // pred_region
      %s24 = ssub.s32 512, 512
      %25 = vsyncadd [#allocation6], %s24
      %s26 = sshll.u32 [#allocation5], 4
      %s27 = int_to_ptr.vmem [resolvable:$true] %s26
      %32 = dma.hbm_to_vmem [thread:$0]  %s1, 512, %s27, [#allocation6], 128, 128, 8
    $region9: #{tpu_custom_call.1} parent=1 // pred_fallthru
      _
    // Predicated region
    $region10: #{tpu_custom_call.1} parent=1 // pred_check
      _
    $region11: #{tpu_custom_call.1} parent=1 // pred_check_branch
      %34 = sbr.rel (0) target = $region13
    $region12: #{tpu_custom_call.1} parent=1 // pred_region
      _
    $region13: #{tpu_custom_call.1} parent=1 // pred_fallthru
      _
    // Predicated region
    $region14: #{tpu_custom_call.1} parent=1 // pred_check
      _
    $region15: #{tpu_custom_call.1} parent=1 // pred_check_branch
      %36 = sbr.rel (0) target = $region17
    $region16: #{tpu_custom_call.1} parent=1 // pred_region
      %37 = dma.done [#allocation3], 32
    $region17: #{tpu_custom_call.1} parent=1 // pred_fallthru
      _
    // Predicated region
    $region18: #{tpu_custom_call.1} parent=1 // pred_check
      _
    $region19: #{tpu_custom_call.1} parent=1 // pred_check_branch
      %39 = sbr.rel (0) target = $region21
    $region20: #{tpu_custom_call.1} parent=1 // pred_region
      %40 = dma.done [#allocation6], 512
    $region21: #{tpu_custom_call.1} parent=1 // pred_fallthru
      _
    %v41 = vld [vmem:[#allocation2] sm:$0x3]
    %v42 = vld [vmem:[#allocation5] sm:$0xff]
    %v43 = vld [vmem:[#allocation5 + $0x8] sm:$0xff]
    %v44 = vld [vmem:[#allocation5 + $0x10] sm:$0xff]
    %v45 = vld [vmem:[#allocation5 + $0x18] sm:$0xff]
    %v46 = vld [vmem:[%s2] sm:$0x1]
    %v48 = vlaneseq
    %v49 = vshrl.u32 %v48, 7
    %v50 = vsub.s32 0, %v49
    %v51 = vrot.slane %v46, %v50
    %vm53 = vcmask 261120
    %v55 = vsel %vm53, %v41, 0
    %57 = vmatprep.subr.mxu0 0.0
    %58 = vmatpush1.msra.mxu0 %v42
    %59 = vmatprep.subr.mxu0 0.0
    %60 = vmatpush1.msra.mxu0 %v43
    %61 = vmatprep.subr.mxu0 0.0
    %62 = vmatpush1.msra.mxu0 %v44
    %63 = vmatprep.subr.mxu0 0.0
    %64 = vmatpush1.msra.mxu0 %v45
    %65 = vmatprep.subr.mxu0 0.0
    %66 = vmatpush1.msra.mxu0 0.0
    %67 = vmatprep.subr.mxu0 0.0
    %68 = vmatpush1.msra.mxu0 0.0
    %69 = vmatprep.subr.mxu0 0.0
    %70 = vmatpush1.msra.mxu0 0.0
    %71 = vmatprep.subr.mxu0 0.0
    %72 = vmatpush1.msra.mxu0 0.0
    %73 = vmatprep.subr.mxu0 0.0
    %74 = vmatpush1.msra.mxu0 0.0
    %75 = vmatprep.subr.mxu0 0.0
    %76 = vmatpush1.msra.mxu0 0.0
    %77 = vmatprep.subr.mxu0 0.0
    %78 = vmatpush1.msra.mxu0 0.0
    %79 = vmatprep.subr.mxu0 0.0
    %80 = vmatpush1.msra.mxu0 0.0
    %81 = vmatprep.subr.mxu0 0.0
    %82 = vmatpush1.msra.mxu0 0.0
    %83 = vmatprep.subr.mxu0 0.0
    %84 = vmatpush1.msra.mxu0 0.0
    %85 = vmatprep.subr.mxu0 0.0
    %86 = vmatpush1.msra.mxu0 0.0
    %87 = vmatprep.subr.mxu0 0.0
    %88 = vmatpush1.msra.mxu0 0.0
    %89 = vmatprep.subr.mxu0 0.0
    %90 = vmatpush1.msra.mxu0 0.0
    %91 = vmatprep.subr.mxu0 0.0
    %92 = vmatpush1.msra.mxu0 0.0
    %93 = vmatprep.subr.mxu0 0.0
    %94 = vmatpush1.msra.mxu0 0.0
    %95 = vmatprep.subr.mxu0 0.0
    %96 = vmatpush1.msra.mxu0 0.0
    %97 = vmatprep.subr.mxu0 0.0
    %98 = vmatpush1.msra.mxu0 0.0
    %99 = vmatprep.subr.mxu0 0.0
    %100 = vmatpush1.msra.mxu0 0.0
    %101 = vmatprep.subr.mxu0 0.0
    %102 = vmatpush1.msra.mxu0 0.0
    %103 = vmatprep.subr.mxu0 0.0
    %104 = vmatpush1.msra.mxu0 0.0
    %105 = vmatprep.subr.mxu0 0.0
    %106 = vmatpush1.msra.mxu0 0.0
    %107 = vmatprep.subr.mxu0 0.0
    %108 = vmatpush1.msra.mxu0 0.0
    %109 = vmatprep.subr.mxu0 0.0
    %110 = vmatpush1.msra.mxu0 0.0
    %111 = vmatprep.subr.mxu0 0.0
    %112 = vmatpush1.msra.mxu0 0.0
    %113 = vmatprep.subr.mxu0 0.0
    %114 = vmatpush1.msra.mxu0 0.0
    %115 = vmatprep.subr.mxu0 0.0
    %116 = vmatpush1.msra.mxu0 0.0
    %117 = vmatprep.subr.mxu0 0.0
    %118 = vmatpush1.msra.mxu0 0.0
    %119 = vmatprep.subr.mxu0 0.0
    %120 = vmatpush1.msra.mxu0 0.0
    %121 = vmatprep.mubr.f32.mxu0 0.0
    %122 = vmatmul.mubr.f32.gmra.mrb[0].mxu0 %v55
    %v123 = vpop.f32.mrb[0].mxu0
    %v124 = vadd.f32 %v51, %v123
    %v125 = vpop.f32.mrb[0].mxu0
    %126 = vdwg.mxu0
    %127 = vst [vmem:[#allocation7] sm:$0x3] %v124
    // Predicated region
    $region22: #{tpu_custom_call.1} parent=1 // pred_check
      _
    $region23: #{tpu_custom_call.1} parent=1 // pred_check_branch
      %129 = sbr.rel (0) target = $region25
    $region24: #{tpu_custom_call.1} parent=1 // pred_region
      %s131 = ssub.s32 32, 32
      %132 = vsyncadd [#allocation4], %s131
      %s134 = sshll.u32 [#allocation7], 4
      %s135 = int_to_ptr.vmem [resolvable:$true] %s134
      %137 = dma.vmem_to_hbm [thread:$0]  %s135, 32, %s3, [#allocation4]
    $region25: #{tpu_custom_call.1} parent=1 // pred_fallthru
      _
    // Predicated region
    $region26: #{tpu_custom_call.1} parent=1 // pred_check
      _
    $region27: #{tpu_custom_call.1} parent=1 // pred_check_branch
      %139 = sbr.rel (0) target = $region29
    $region28: #{tpu_custom_call.1} parent=1 // pred_region
      %140 = dma.done [#allocation4], 32
    $region29: #{tpu_custom_call.1} parent=1 // pred_fallthru
      _
    %141 = vsyncpa [#allocation3], 1
    %142 = vsyncpa [#allocation6], 1
    %143 = vsyncpa [#allocation4], 1

</llo_original>
